<compile_context>
chip_gen: v5e
topology: v5e:2x2
jax: 0.10.0
libtpu: 0.0.40
codegen_flags: <defaults>
</compile_context>

<pallas_src>
import jax
import jax.numpy as jnp
import numpy as np
from jax.experimental import pallas as pl
from jax.experimental.pallas import tpu as pltpu


def _round_up(x, m):
    return ((x + m - 1) // m) * m


def word_avg_kernel(tok_ref, emb_ref, w_ref, b_ref, out_ref, acc_ref):
    """acc += counts_tile^T @ emb_tile; fc applied at the last vocab tile."""
    j = pl.program_id(1)                      # vocab-tile index (reduction axis)

    @pl.when(j == 0)
    def _init():
        acc_ref[...] = jnp.zeros_like(acc_ref)

    S, TB = tok_ref.shape                     # seq on sublanes, batch on lanes
    TV, _E_pad = emb_ref.shape                # vocab tile, padded emb dim

    # Vocab ids of this tile, laid out (TV sublanes, TB lanes); hoisted out of
    # the S-loop (JAX does not CSE broadcast_in_dim).
    vocab_ids = j * TV + jax.lax.broadcasted_iota(jnp.int32, (TV, TB), 0)

    def body(s, counts):
        tok_s = tok_ref[pl.ds(s, 1), :]                        # (1, TB) int32 row
        return counts + (tok_s == vocab_ids).astype(jnp.int32)  # int32 compare/add

    counts = jax.lax.fori_loop(
        0, S, body, jnp.zeros((TV, TB), jnp.int32),
        unroll=True if S <= 64 else 8)

    # Partial (unnormalized) average embedding for this vocab tile on the MXU:
    # (TV, TB)^T @ (TV, E_pad) -> (TB, E_pad).  counts <= S are exact in bf16
    # for S <= 256, so an optional bf16 emb table only adds bf16 weight error.
    acc_ref[...] += jax.lax.dot_general(
        counts.astype(emb_ref.dtype), emb_ref[...],
        dimension_numbers=(((0,), (0,)), ((), ())),
        preferred_element_type=jnp.float32)

    @pl.when(j == pl.num_programs(1) - 1)
    def _finalize():
        avg = acc_ref[...] * jnp.float32(1.0 / S)              # single scale on (TB, E_pad)
        out_ref[...] = (jnp.dot(avg, w_ref[...], preferred_element_type=jnp.float32)
                        + b_ref[...])


def word_avg_forward(tokens_sb, emb_table, fc_w, fc_b, *,
                     batch_tile=256, vocab_tile=1024, mxu_dtype=jnp.float32):
    """tokens_sb: (seq_len, batch) int; emb_table: (V, E); fc_w: (O, E); fc_b: (O,)."""
    S, B = tokens_sb.shape
    V, E = emb_table.shape
    O = fc_w.shape[0]

    # ---- layout prep (plain XLA, outside the kernel) ----
    E_pad = _round_up(E, 128)                 # lane-dense emb dim (full MXU width)
    O_pad = _round_up(O, 128)                 # lane-dense output slab (unmasked vst)

    # Batch tiling: batch is the lane dim of the token block and the sublane dim
    # of acc/out.  Prefer >=2 tiles so the "parallel" axis shards over v7x's 2 TCs.
    if B > 128:
        TB = min(_round_up(batch_tile, 128), _round_up(B, 128))
        if _round_up(B, TB) // TB < 2 and TB > 128:
            TB = max(128, (TB // 2) // 128 * 128)
        B_pad = _round_up(B, TB)
    else:
        B_pad = _round_up(max(B, 1), 8)
        TB = B_pad

    # Vocab tiling (reduction axis). Larger tiles amortize per-step overhead now
    # that the per-step footprint is only a few hundred KiB.
    TV = min(_round_up(vocab_tile, 128), _round_up(V, 128))
    V_pad = _round_up(V, TV)

    # Tokens kept in native (seq, batch) layout; padded batch columns use the
    # out-of-range id V_pad so they match no vocab tile (no spurious counts).
    tok = jnp.pad(tokens_sb.astype(jnp.int32), ((0, 0), (0, B_pad - B)),
                  constant_values=V_pad)                              # (S, B_pad)
    emb_p = jnp.pad(emb_table.astype(jnp.float32),
                    ((0, V_pad - V), (0, E_pad - E))).astype(mxu_dtype)  # (V_pad, E_pad)
    w_t = jnp.pad(jnp.transpose(fc_w).astype(jnp.float32),
                  ((0, E_pad - E), (0, O_pad - O)))                   # (E_pad, O_pad)
    b_p = jnp.pad(fc_b.astype(jnp.float32), (0, O_pad - O)).reshape(1, O_pad)

    grid = (B_pad // TB, V_pad // TV)                                 # (parallel, reduction)

    out_padded = pl.pallas_call(
        word_avg_kernel,
        out_shape=jax.ShapeDtypeStruct((B_pad, O_pad), jnp.float32),
        grid_spec=pltpu.PrefetchScalarGridSpec(
            num_scalar_prefetch=0,
            grid=grid,
            in_specs=[
                pl.BlockSpec((S, TB), lambda i, j: (0, i)),           # tokens (seq, batch tile)
                pl.BlockSpec((TV, E_pad), lambda i, j: (j, 0)),       # embedding table tile
                pl.BlockSpec((E_pad, O_pad), lambda i, j: (0, 0)),    # fc weight^T (full)
                pl.BlockSpec((1, O_pad), lambda i, j: (0, 0)),        # fc bias (full)
            ],
            out_specs=pl.BlockSpec((TB, O_pad), lambda i, j: (i, 0)),
            scratch_shapes=[pltpu.VMEM((TB, E_pad), jnp.float32)],    # avg-emb accumulator
        ),
        compiler_params=pltpu.CompilerParams(
            dimension_semantics=("parallel", "arbitrary"),
            vmem_limit_bytes=32 * 1024 * 1024,   # fits v5e/v6e (128 MiB) and v7x (64 MiB)
        ),
    )(tok, emb_p, w_t, b_p)

    return out_padded[:B, :O]


def word_avg_reference(tokens_sb, emb_table, fc_w, fc_b):
    """Pure-JAX reference mirroring the PyTorch forward exactly."""
    emb = jnp.take(emb_table, tokens_sb, axis=0)          # (S, B, E)
    emb = jnp.transpose(emb, (1, 0, 2))                   # (B, S, E)
    avg = jnp.mean(emb, axis=1)                           # (B, E)
    return avg @ fc_w.T + fc_b                            # (B, O)


def _make_inputs(key, vocab_size, embedding_dim, output_dim, pad_idx, seq_len, batch):
    k_emb, k_w, k_b, k_tok = jax.random.split(key, 4)
    emb_table = jax.random.normal(k_emb, (vocab_size, embedding_dim), jnp.float32)
    emb_table = emb_table.at[pad_idx].set(0.0)            # nn.Embedding padding_idx row
    bound = 1.0 / np.sqrt(embedding_dim)
    fc_w = jax.random.uniform(k_w, (output_dim, embedding_dim), jnp.float32, -bound, bound)
    fc_b = jax.random.uniform(k_b, (output_dim,), jnp.float32, -bound, bound)
    tokens = jax.random.randint(k_tok, (seq_len, batch), 0, vocab_size, jnp.int32)
    tokens = tokens.at[-1, :].set(pad_idx)                # include some pad tokens
    return tokens, emb_table, fc_w, fc_b


if __name__ == "__main__":
    key = jax.random.PRNGKey(0)
    k1, k2 = jax.random.split(key)

    # --- Config consistent with WordAVGModel.__init__ (small, deterministic) ---
    tokens, emb_table, fc_w, fc_b = _make_inputs(
        k1, vocab_size=50, embedding_dim=32, output_dim=1, pad_idx=0,
        seq_len=8, batch=2)

    out = jax.block_until_ready(word_avg_forward(tokens, emb_table, fc_w, fc_b))
    ref = word_avg_reference(tokens, emb_table, fc_w, fc_b)
    assert out.shape == (2, 1)
    np.testing.assert_allclose(np.asarray(out), np.asarray(ref), rtol=1e-5, atol=1e-5)

    # bf16 MXU feed (review item for v5e/v6e/v7x): looser tolerance for bf16 weights.
    out_bf16 = jax.block_until_ready(
        word_avg_forward(tokens, emb_table, fc_w, fc_b, mxu_dtype=jnp.bfloat16))
    np.testing.assert_allclose(np.asarray(out_bf16), np.asarray(ref), rtol=2e-2, atol=2e-2)

    # --- Second config: multiple vocab tiles + non-aligned batch, exercises the
    #     accumulator / padding paths. ---
    tokens2, emb2, w2, b2 = _make_inputs(
        k2, vocab_size=300, embedding_dim=64, output_dim=3, pad_idx=0,
        seq_len=24, batch=5)
    out2 = jax.block_until_ready(
        word_avg_forward(tokens2, emb2, w2, b2, vocab_tile=128))
    ref2 = word_avg_reference(tokens2, emb2, w2, b2)
    assert out2.shape == (5, 3)
    np.testing.assert_allclose(np.asarray(out2), np.asarray(ref2), rtol=1e-5, atol=1e-5)

    print("KERNEL_OK")
</pallas_src>

<mosaic_0001>
module attributes {stable_mosaic.version = 11 : i64} {
  func.func @word_avg_kernel(%arg0: i32, %arg1: i32, %arg2: memref<8x8xi32, #tpu.memory_space<vmem>>, %arg3: memref<128x128xf32, #tpu.memory_space<vmem>>, %arg4: memref<128x128xf32, #tpu.memory_space<vmem>>, %arg5: memref<1x128xf32, #tpu.memory_space<vmem>>, %arg6: memref<8x128xf32, #tpu.memory_space<vmem>>, %arg7: memref<8x128xf32, #tpu.memory_space<vmem>>) attributes {dimension_semantics = [#tpu.dimension_semantics<parallel>, #tpu.dimension_semantics<arbitrary>], iteration_bounds = array<i64: 1, 1>, scalar_prefetch = 0 : i64, scratch_operands = 1 : i64, tpu.core_type = #tpu.core_type<tc>, window_params = [{transform_indices = @transform_0, window_bounds = array<i64: 8, 8>}, {transform_indices = @transform_1, window_bounds = array<i64: 128, 128>}, {pipeline_mode = #tpu.pipeline_mode<synchronous>, transform_indices = @transform_2, window_bounds = array<i64: 128, 128>}, {pipeline_mode = #tpu.pipeline_mode<synchronous>, transform_indices = @transform_3, window_bounds = array<i64: 1, 128>}, {transform_indices = @transform_4, window_bounds = array<i64: 8, 128>}]} {
    %c0_i32 = arith.constant 0 : i32
    %0 = arith.cmpi eq, %arg1, %c0_i32 : i32
    %1 = arith.extui %0 : i1 to i32
    %c0_i32_0 = arith.constant 0 : i32
    %2 = arith.cmpi ne, %1, %c0_i32_0 : i32
    scf.if %2 {
      %cst_18 = arith.constant 0.000000e+00 : f32
      %65 = vector.broadcast %cst_18 : f32 to vector<8x128xf32>
      %c0_19 = arith.constant 0 : index
      %c0_20 = arith.constant 0 : index
      %66 = vector.load %arg7[%c0_19, %c0_20] : memref<8x128xf32, #tpu.memory_space<vmem>>, vector<8x128xf32>
      tpu.vector_store %arg7[%c0_19, %c0_20], %65 {strides = array<i32>} : memref<8x128xf32, #tpu.memory_space<vmem>>, vector<8x128xf32>,
    } else {
    }
    %c128_i32 = arith.constant 128 : i32
    %3 = arith.muli %arg1, %c128_i32 : i32
    %4 = tpu.iota {dimensions = array<i32: 0>} : vector<128x8xi32>
    %5 = vector.broadcast %3 : i32 to vector<128x8xi32>
    %6 = arith.addi %5, %4 : vector<128x8xi32>
    %c0_i32_1 = arith.constant 0 : i32
    %7 = vector.broadcast %c0_i32_1 : i32 to vector<128x8xi32>
    %c0_i32_2 = arith.constant 0 : i32
    %8 = arith.index_cast %c0_i32_2 : i32 to index
    %c0 = arith.constant 0 : index
    %9 = vector.load %arg2[%8, %c0] : memref<8x8xi32, #tpu.memory_space<vmem>>, vector<1x8xi32>
    %10 = vector.broadcast %9 : vector<1x8xi32> to vector<128x8xi32>
    %11 = arith.cmpi eq, %10, %6 : vector<128x8xi32>
    %12 = arith.extui %11 : vector<128x8xi1> to vector<128x8xi32>
    %13 = arith.addi %7, %12 : vector<128x8xi32>
    %c1_i32 = arith.constant 1 : i32
    %14 = arith.index_cast %c1_i32 : i32 to index
    %c0_3 = arith.constant 0 : index
    %15 = vector.load %arg2[%14, %c0_3] : memref<8x8xi32, #tpu.memory_space<vmem>>, vector<1x8xi32>
    %16 = vector.broadcast %15 : vector<1x8xi32> to vector<128x8xi32>
    %17 = arith.cmpi eq, %16, %6 : vector<128x8xi32>
    %18 = arith.extui %17 : vector<128x8xi1> to vector<128x8xi32>
    %19 = arith.addi %13, %18 : vector<128x8xi32>
    %c2_i32 = arith.constant 2 : i32
    %20 = arith.index_cast %c2_i32 : i32 to index
    %c0_4 = arith.constant 0 : index
    %21 = vector.load %arg2[%20, %c0_4] : memref<8x8xi32, #tpu.memory_space<vmem>>, vector<1x8xi32>
    %22 = vector.broadcast %21 : vector<1x8xi32> to vector<128x8xi32>
    %23 = arith.cmpi eq, %22, %6 : vector<128x8xi32>
    %24 = arith.extui %23 : vector<128x8xi1> to vector<128x8xi32>
    %25 = arith.addi %19, %24 : vector<128x8xi32>
    %c3_i32 = arith.constant 3 : i32
    %26 = arith.index_cast %c3_i32 : i32 to index
    %c0_5 = arith.constant 0 : index
    %27 = vector.load %arg2[%26, %c0_5] : memref<8x8xi32, #tpu.memory_space<vmem>>, vector<1x8xi32>
    %28 = vector.broadcast %27 : vector<1x8xi32> to vector<128x8xi32>
    %29 = arith.cmpi eq, %28, %6 : vector<128x8xi32>
    %30 = arith.extui %29 : vector<128x8xi1> to vector<128x8xi32>
    %31 = arith.addi %25, %30 : vector<128x8xi32>
    %c4_i32 = arith.constant 4 : i32
    %32 = arith.index_cast %c4_i32 : i32 to index
    %c0_6 = arith.constant 0 : index
    %33 = vector.load %arg2[%32, %c0_6] : memref<8x8xi32, #tpu.memory_space<vmem>>, vector<1x8xi32>
    %34 = vector.broadcast %33 : vector<1x8xi32> to vector<128x8xi32>
    %35 = arith.cmpi eq, %34, %6 : vector<128x8xi32>
    %36 = arith.extui %35 : vector<128x8xi1> to vector<128x8xi32>
    %37 = arith.addi %31, %36 : vector<128x8xi32>
    %c5_i32 = arith.constant 5 : i32
    %38 = arith.index_cast %c5_i32 : i32 to index
    %c0_7 = arith.constant 0 : index
    %39 = vector.load %arg2[%38, %c0_7] : memref<8x8xi32, #tpu.memory_space<vmem>>, vector<1x8xi32>
    %40 = vector.broadcast %39 : vector<1x8xi32> to vector<128x8xi32>
    %41 = arith.cmpi eq, %40, %6 : vector<128x8xi32>
    %42 = arith.extui %41 : vector<128x8xi1> to vector<128x8xi32>
    %43 = arith.addi %37, %42 : vector<128x8xi32>
    %c6_i32 = arith.constant 6 : i32
    %44 = arith.index_cast %c6_i32 : i32 to index
    %c0_8 = arith.constant 0 : index
    %45 = vector.load %arg2[%44, %c0_8] : memref<8x8xi32, #tpu.memory_space<vmem>>, vector<1x8xi32>
    %46 = vector.broadcast %45 : vector<1x8xi32> to vector<128x8xi32>
    %47 = arith.cmpi eq, %46, %6 : vector<128x8xi32>
    %48 = arith.extui %47 : vector<128x8xi1> to vector<128x8xi32>
    %49 = arith.addi %43, %48 : vector<128x8xi32>
    %c7_i32 = arith.constant 7 : i32
    %50 = arith.index_cast %c7_i32 : i32 to index
    %c0_9 = arith.constant 0 : index
    %51 = vector.load %arg2[%50, %c0_9] : memref<8x8xi32, #tpu.memory_space<vmem>>, vector<1x8xi32>
    %52 = vector.broadcast %51 : vector<1x8xi32> to vector<128x8xi32>
    %53 = arith.cmpi eq, %52, %6 : vector<128x8xi32>
    %54 = arith.extui %53 : vector<128x8xi1> to vector<128x8xi32>
    %55 = arith.addi %49, %54 : vector<128x8xi32>
    %c8_i32 = arith.constant 8 : i32
    %c0_10 = arith.constant 0 : index
    %c0_11 = arith.constant 0 : index
    %56 = vector.load %arg7[%c0_10, %c0_11] : memref<8x128xf32, #tpu.memory_space<vmem>>, vector<8x128xf32>
    %57 = arith.sitofp %55 : vector<128x8xi32> to vector<128x8xf32>
    %c0_12 = arith.constant 0 : index
    %c0_13 = arith.constant 0 : index
    %58 = vector.load %arg3[%c0_12, %c0_13] : memref<128x128xf32, #tpu.memory_space<vmem>>, vector<128x128xf32>
    %cst = arith.constant dense<0.000000e+00> : vector<8x128xf32>
    %59 = tpu.matmul %57, %58, %cst {dimension_numbers = #tpu.dot_dimension_numbers<[0], [0], [1], [1], [0, 1, 1, 1], [], []>} : vector<128x8xf32>, vector<128x128xf32>, vector<8x128xf32> -> vector<8x128xf32>
    %60 = arith.addf %56, %59 : vector<8x128xf32>
    %c0_14 = arith.constant 0 : index
    %c0_15 = arith.constant 0 : index
    %61 = vector.load %arg7[%c0_14, %c0_15] : memref<8x128xf32, #tpu.memory_space<vmem>>, vector<8x128xf32>
    tpu.vector_store %arg7[%c0_14, %c0_15], %60 {strides = array<i32>} : memref<8x128xf32, #tpu.memory_space<vmem>>, vector<8x128xf32>,
    %c0_i32_16 = arith.constant 0 : i32
    %62 = arith.cmpi eq, %arg1, %c0_i32_16 : i32
    %63 = arith.extui %62 : i1 to i32
    %c0_i32_17 = arith.constant 0 : i32
    %64 = arith.cmpi ne, %63, %c0_i32_17 : i32
    scf.if %64 {
      %c0_18 = arith.constant 0 : index
      %c0_19 = arith.constant 0 : index
      %65 = vector.load %arg7[%c0_18, %c0_19] : memref<8x128xf32, #tpu.memory_space<vmem>>, vector<8x128xf32>
      %cst_20 = arith.constant 1.250000e-01 : f32
      %66 = vector.broadcast %cst_20 : f32 to vector<8x128xf32>
      %67 = arith.mulf %65, %66 : vector<8x128xf32>
      %c0_21 = arith.constant 0 : index
      %c0_22 = arith.constant 0 : index
      %68 = vector.load %arg4[%c0_21, %c0_22] : memref<128x128xf32, #tpu.memory_space<vmem>>, vector<128x128xf32>
      %cst_23 = arith.constant dense<0.000000e+00> : vector<8x128xf32>
      %69 = tpu.matmul %67, %68, %cst_23 {dimension_numbers = #tpu.dot_dimension_numbers<[1], [0], [0], [1], [0, 0, 1, 1], [], []>} : vector<8x128xf32>, vector<128x128xf32>, vector<8x128xf32> -> vector<8x128xf32>
      %c0_24 = arith.constant 0 : index
      %c0_25 = arith.constant 0 : index
      %70 = vector.load %arg5[%c0_24, %c0_25] : memref<1x128xf32, #tpu.memory_space<vmem>>, vector<1x128xf32>
      %71 = vector.broadcast %70 : vector<1x128xf32> to vector<8x128xf32>
      %72 = arith.addf %69, %71 : vector<8x128xf32>
      %c0_26 = arith.constant 0 : index
      %c0_27 = arith.constant 0 : index
      %73 = vector.load %arg6[%c0_26, %c0_27] : memref<8x128xf32, #tpu.memory_space<vmem>>, vector<8x128xf32>
      tpu.vector_store %arg6[%c0_26, %c0_27], %72 {strides = array<i32>} : memref<8x128xf32, #tpu.memory_space<vmem>>, vector<8x128xf32>,
    } else {
    }
    return
  }
  func.func @transform_0(%arg0: i32, %arg1: i32) -> (i32, i32) {
    %c0_i32 = arith.constant 0 : i32
    %c0_i32_0 = arith.constant 0 : i32
    return %c0_i32, %arg0 : i32, i32
  }
  func.func @transform_1(%arg0: i32, %arg1: i32) -> (i32, i32) {
    %c0_i32 = arith.constant 0 : i32
    %c0_i32_0 = arith.constant 0 : i32
    return %arg1, %c0_i32 : i32, i32
  }
  func.func @transform_2(%arg0: i32, %arg1: i32) -> (i32, i32) {
    %c0_i32 = arith.constant 0 : i32
    %c0_i32_0 = arith.constant 0 : i32
    %c0_i32_1 = arith.constant 0 : i32
    return %c0_i32, %c0_i32_0 : i32, i32
  }
  func.func @transform_3(%arg0: i32, %arg1: i32) -> (i32, i32) {
    %c0_i32 = arith.constant 0 : i32
    %c0_i32_0 = arith.constant 0 : i32
    %c0_i32_1 = arith.constant 0 : i32
    return %c0_i32, %c0_i32_0 : i32, i32
  }
  func.func @transform_4(%arg0: i32, %arg1: i32) -> (i32, i32) {
    %c0_i32 = arith.constant 0 : i32
    %c0_i32_0 = arith.constant 0 : i32
    return %arg0, %c0_i32 : i32, i32
  }
}

</mosaic_0001>

<llo_original>
// kernel: tpu_custom_call.1
$region0: #{tpu_custom_call.1}
  #allocation0 [shape = 'u32[]', space=smem, size = 0x4, offset = 0x4, fixed_abs, tag = 'smem constant byte address 0x4 - core index']
  #allocation1 [shape = 'u32[72,128]{1,0:T(1,128)}', space=vmem, size = 0x9000, scoped, tag = 'internal scratch']
  #allocation2 [shape = 'f32[8,128]{1,0:T(8,128)}', space=vmem, size = 0x1000, scoped, tag = 'scratch operand']
  %s0 = inlined_call_operand.hbm [shape: s32[8,8], index: 0, kind: input, shape index: {}]
  %s1 = inlined_call_operand.hbm [shape: f32[128,128], index: 1, kind: input, shape index: {}]
  %s2 = inlined_call_operand.hbm [shape: f32[128,128], index: 2, kind: input, shape index: {}]
  %s3 = inlined_call_operand.vmem [shape: f32[1,128], index: 3, kind: input, shape index: {}]
  %s4 = inlined_call_operand.hbm [shape: f32[8,128], index: 4, kind: output, shape index: {}]
  %s5 = sld [smem:[#allocation0]]
  $region46: #{tpu_custom_call.1} parent=0
    _
  %s7 = ssub.s32 1, %s5
  %s8 = scalar_select 0, %s7, %s5
  $region1: #{tpu_custom_call.1} parent=0
    #allocation3 [shape = 'u8[4096]{0}', space=vmem, size = 0x1000, scoped, tag = 'input window, operand 0, single buffered']
    #allocation4 [shape = 's32[1]{0}', space=sflag, size = 0x4, scoped, tag = 'scoped memory for tpu_custom_call.1']
    #allocation5 [shape = 's32[1]{0}', space=sflag, size = 0x4, scoped, tag = 'scoped memory for tpu_custom_call.1']
    #allocation6 [shape = 'u8[65536]{0}', space=vmem, size = 0x10000, scoped, tag = 'input window, operand 1, single buffered']
    #allocation7 [shape = 's32[1]{0}', space=sflag, size = 0x4, scoped, tag = 'scoped memory for tpu_custom_call.1']
    #allocation8 [shape = 'u8[65536]{0}', space=vmem, size = 0x10000, scoped, tag = 'input window, operand 2, single buffered']
    #allocation9 [shape = 'u8[4096]{0}', space=vmem, size = 0x1000, scoped, tag = 'output window, operand 0, single buffered']
    %9 = vsyncpa [#allocation4], 0
    %10 = vsyncpa [#allocation7], 0
    %11 = vsyncpa [#allocation5], 0
    // Predicated region
    $region2: #{tpu_custom_call.1} parent=1 // pred_check
      _
    $region3: #{tpu_custom_call.1} parent=1 // pred_check_branch
      %13 = sbr.rel (0) target = $region5
    $region4: #{tpu_custom_call.1} parent=1 // pred_region
      %15 = vsyncadd [#allocation4], 0
      %s17 = sshll.u32 %s0, 4
      %s18 = int_to_ptr.hbm [resolvable:$true] %s17
      %s19 = sshll.u32 [#allocation3], 4
      %s20 = int_to_ptr.vmem [resolvable:$true] %s19
      %22 = dma.hbm_to_vmem [thread:$0]  %s18, 128, %s20, [#allocation4]
    $region5: #{tpu_custom_call.1} parent=1 // pred_fallthru
      _
    // Predicated region
    $region6: #{tpu_custom_call.1} parent=1 // pred_check
      _
    $region7: #{tpu_custom_call.1} parent=1 // pred_check_branch
      %24 = sbr.rel (0) target = $region9
    $region8: #{tpu_custom_call.1} parent=1 // pred_region
      %26 = vsyncadd [#allocation7], 0
      %s27 = sshll.u32 %s1, 4
      %s28 = int_to_ptr.hbm [resolvable:$true] %s27
      %s29 = sshll.u32 [#allocation6], 4
      %s30 = int_to_ptr.vmem [resolvable:$true] %s29
      %35 = dma.hbm_to_vmem [thread:$0]  %s28, 2048, %s30, [#allocation7], 128, 128, 8
    $region9: #{tpu_custom_call.1} parent=1 // pred_fallthru
      _
    // Predicated region
    $region10: #{tpu_custom_call.1} parent=1 // pred_check
      _
    $region11: #{tpu_custom_call.1} parent=1 // pred_check_branch
      %37 = sbr.rel (0) target = $region13
    $region12: #{tpu_custom_call.1} parent=1 // pred_region
      %39 = vsyncadd [#allocation7], 0
      %s40 = sshll.u32 %s2, 4
      %s41 = int_to_ptr.hbm [resolvable:$true] %s40
      %s42 = sshll.u32 [#allocation8], 4
      %s43 = int_to_ptr.vmem [resolvable:$true] %s42
      %48 = dma.hbm_to_vmem [thread:$0]  %s41, 2048, %s43, [#allocation7], 128, 128, 8
    $region13: #{tpu_custom_call.1} parent=1 // pred_fallthru
      _
    // Predicated region
    $region14: #{tpu_custom_call.1} parent=1 // pred_check
      _
    $region15: #{tpu_custom_call.1} parent=1 // pred_check_branch
      %50 = sbr.rel (0) target = $region17
    $region16: #{tpu_custom_call.1} parent=1 // pred_region
      _
    $region17: #{tpu_custom_call.1} parent=1 // pred_fallthru
      _
    // Predicated region
    $region18: #{tpu_custom_call.1} parent=1 // pred_check
      _
    $region19: #{tpu_custom_call.1} parent=1 // pred_check_branch
      %52 = sbr.rel (0) target = $region21
    $region20: #{tpu_custom_call.1} parent=1 // pred_region
      %54 = dma.done [#allocation4], 128
    $region21: #{tpu_custom_call.1} parent=1 // pred_fallthru
      _
    // Predicated region
    $region22: #{tpu_custom_call.1} parent=1 // pred_check
      _
    $region23: #{tpu_custom_call.1} parent=1 // pred_check_branch
      %56 = sbr.rel (0) target = $region25
    $region24: #{tpu_custom_call.1} parent=1 // pred_region
      %58 = dma.done [#allocation7], 2048
    $region25: #{tpu_custom_call.1} parent=1 // pred_fallthru
      _
    // Predicated region
    $region26: #{tpu_custom_call.1} parent=1 // pred_check
      _
    $region27: #{tpu_custom_call.1} parent=1 // pred_check_branch
      %60 = sbr.rel (0) target = $region29
    $region28: #{tpu_custom_call.1} parent=1 // pred_region
      %62 = dma.done [#allocation7], 2048
    $region29: #{tpu_custom_call.1} parent=1 // pred_fallthru
      _
    %p63 = scmp.eq.s32.totalorder 0, 0
    // Predicated region
    $region30: #{tpu_custom_call.1} parent=1 // pred_check
      %p64 = pneg %p63
    $region31: #{tpu_custom_call.1} parent=1 // pred_check_branch
      %66 = sbr.rel (%p64) target = $region33
    $region32: #{tpu_custom_call.1} parent=1 // pred_region
      %67 = vst [vmem:[#allocation2] sm:$0xff] 0.0
    $region33: #{tpu_custom_call.1} parent=1 // pred_fallthru
      _
    %s68 = smul.u32 0, 128
    %v69 = vlaneseq
    %v70 = vshrl.u32 %v69, 7
    %v71 = vadd.s32 %v70, 8
    %v72 = vadd.s32 %v70, 16
    %v73 = vadd.s32 %v70, 24
    %v74 = vadd.s32 %v70, 32
    %v75 = vadd.s32 %v70, 40
    %v76 = vadd.s32 %v70, 48
    %v77 = vadd.s32 %v70, 56
    %v78 = vadd.s32 %v70, 64
    %v79 = vadd.s32 %v70, 72
    %v80 = vadd.s32 %v70, 80
    %v81 = vadd.s32 %v70, 88
    %v82 = vadd.s32 %v70, 96
    %v83 = vadd.s32 %v70, 104
    %v84 = vadd.s32 %v70, 112
    %v85 = vadd.s32 %v70, 120
    %v86 = vstv %s68
    %v87 = vadd.s32 %v86, %v70
    %v88 = vadd.s32 %v86, %v71
    %v89 = vadd.s32 %v86, %v72
    %v90 = vadd.s32 %v86, %v73
    %v91 = vadd.s32 %v86, %v74
    %v92 = vadd.s32 %v86, %v75
    %v93 = vadd.s32 %v86, %v76
    %v94 = vadd.s32 %v86, %v77
    %v95 = vadd.s32 %v86, %v78
    %v96 = vadd.s32 %v86, %v79
    %v97 = vadd.s32 %v86, %v80
    %v98 = vadd.s32 %v86, %v81
    %v99 = vadd.s32 %v86, %v82
    %v100 = vadd.s32 %v86, %v83
    %v101 = vadd.s32 %v86, %v84
    %v102 = vadd.s32 %v86, %v85
    %v103 = vld [vmem:[#allocation3] sm:$0x1]
    %v104 = vperm.slane %v103, 0
    %vm105 = vcmp.eq.s32.totalorder %v104, %v87
    %vm106 = vcmp.eq.s32.totalorder %v104, %v88
    %vm107 = vcmp.eq.s32.totalorder %v104, %v89
    %vm108 = vcmp.eq.s32.totalorder %v104, %v90
    %vm109 = vcmp.eq.s32.totalorder %v104, %v91
    %vm110 = vcmp.eq.s32.totalorder %v104, %v92
    %vm111 = vcmp.eq.s32.totalorder %v104, %v93
    %vm112 = vcmp.eq.s32.totalorder %v104, %v94
    %vm113 = vcmp.eq.s32.totalorder %v104, %v95
    %vm114 = vcmp.eq.s32.totalorder %v104, %v96
    %vm115 = vcmp.eq.s32.totalorder %v104, %v97
    %vm116 = vcmp.eq.s32.totalorder %v104, %v98
    %vm117 = vcmp.eq.s32.totalorder %v104, %v99
    %vm118 = vcmp.eq.s32.totalorder %v104, %v100
    %vm119 = vcmp.eq.s32.totalorder %v104, %v101
    %vm120 = vcmp.eq.s32.totalorder %v104, %v102
    %v121 = vsel %vm105, 1, 0
    %v122 = vsel %vm106, 1, 0
    %v123 = vsel %vm107, 1, 0
    %v124 = vsel %vm108, 1, 0
    %v125 = vsel %vm109, 1, 0
    %v126 = vsel %vm110, 1, 0
    %v127 = vsel %vm111, 1, 0
    %v128 = vsel %vm112, 1, 0
    %v129 = vsel %vm113, 1, 0
    %v130 = vsel %vm114, 1, 0
    %v131 = vsel %vm115, 1, 0
    %v132 = vsel %vm116, 1, 0
    %v133 = vsel %vm117, 1, 0
    %v134 = vsel %vm118, 1, 0
    %v135 = vsel %vm119, 1, 0
    %v136 = vsel %vm120, 1, 0
    %v137 = vld [vmem:[#allocation3 + $0x1] sm:$0x1]
    %v138 = vperm.slane %v137, 0
    %vm139 = vcmp.eq.s32.totalorder %v138, %v87
    %vm140 = vcmp.eq.s32.totalorder %v138, %v88
    %vm141 = vcmp.eq.s32.totalorder %v138, %v89
    %vm142 = vcmp.eq.s32.totalorder %v138, %v90
    %vm143 = vcmp.eq.s32.totalorder %v138, %v91
    %vm144 = vcmp.eq.s32.totalorder %v138, %v92
    %vm145 = vcmp.eq.s32.totalorder %v138, %v93
    %vm146 = vcmp.eq.s32.totalorder %v138, %v94
    %vm147 = vcmp.eq.s32.totalorder %v138, %v95
    %vm148 = vcmp.eq.s32.totalorder %v138, %v96
    %vm149 = vcmp.eq.s32.totalorder %v138, %v97
    %vm150 = vcmp.eq.s32.totalorder %v138, %v98
    %vm151 = vcmp.eq.s32.totalorder %v138, %v99
    %vm152 = vcmp.eq.s32.totalorder %v138, %v100
    %vm153 = vcmp.eq.s32.totalorder %v138, %v101
    %vm154 = vcmp.eq.s32.totalorder %v138, %v102
    %v155 = vsel %vm139, 1, 0
    %v156 = vsel %vm140, 1, 0
    %v157 = vsel %vm141, 1, 0
    %v158 = vsel %vm142, 1, 0
    %v159 = vsel %vm143, 1, 0
    %v160 = vsel %vm144, 1, 0
    %v161 = vsel %vm145, 1, 0
    %v162 = vsel %vm146, 1, 0
    %v163 = vsel %vm147, 1, 0
    %v164 = vsel %vm148, 1, 0
    %v165 = vsel %vm149, 1, 0
    %v166 = vsel %vm150, 1, 0
    %v167 = vsel %vm151, 1, 0
    %v168 = vsel %vm152, 1, 0
    %v169 = vsel %vm153, 1, 0
    %v170 = vsel %vm154, 1, 0
    %v171 = vadd.s32 %v121, %v155
    %v172 = vadd.s32 %v122, %v156
    %v173 = vadd.s32 %v123, %v157
    %v174 = vadd.s32 %v124, %v158
    %v175 = vadd.s32 %v125, %v159
    %v176 = vadd.s32 %v126, %v160
    %v177 = vadd.s32 %v127, %v161
    %v178 = vadd.s32 %v128, %v162
    %v179 = vadd.s32 %v129, %v163
    %v180 = vadd.s32 %v130, %v164
    %v181 = vadd.s32 %v131, %v165
    %v182 = vadd.s32 %v132, %v166
    %v183 = vadd.s32 %v133, %v167
    %v184 = vadd.s32 %v134, %v168
    %v185 = vadd.s32 %v135, %v169
    %v186 = vadd.s32 %v136, %v170
    %v187 = vld [vmem:[#allocation3 + $0x2] sm:$0x1]
    %v188 = vperm.slane %v187, 0
    %vm189 = vcmp.eq.s32.totalorder %v188, %v87
    %vm190 = vcmp.eq.s32.totalorder %v188, %v88
    %vm191 = vcmp.eq.s32.totalorder %v188, %v89
    %vm192 = vcmp.eq.s32.totalorder %v188, %v90
    %vm193 = vcmp.eq.s32.totalorder %v188, %v91
    %vm194 = vcmp.eq.s32.totalorder %v188, %v92
    %vm195 = vcmp.eq.s32.totalorder %v188, %v93
    %vm196 = vcmp.eq.s32.totalorder %v188, %v94
    %vm197 = vcmp.eq.s32.totalorder %v188, %v95
    %vm198 = vcmp.eq.s32.totalorder %v188, %v96
    %vm199 = vcmp.eq.s32.totalorder %v188, %v97
    %vm200 = vcmp.eq.s32.totalorder %v188, %v98
    %vm201 = vcmp.eq.s32.totalorder %v188, %v99
    %vm202 = vcmp.eq.s32.totalorder %v188, %v100
    %vm203 = vcmp.eq.s32.totalorder %v188, %v101
    %vm204 = vcmp.eq.s32.totalorder %v188, %v102
    %v205 = vsel %vm189, 1, 0
    %v206 = vsel %vm190, 1, 0
    %v207 = vsel %vm191, 1, 0
    %v208 = vsel %vm192, 1, 0
    %v209 = vsel %vm193, 1, 0
    %v210 = vsel %vm194, 1, 0
    %v211 = vsel %vm195, 1, 0
    %v212 = vsel %vm196, 1, 0
    %v213 = vsel %vm197, 1, 0
    %v214 = vsel %vm198, 1, 0
    %v215 = vsel %vm199, 1, 0
    %v216 = vsel %vm200, 1, 0
    %v217 = vsel %vm201, 1, 0
    %v218 = vsel %vm202, 1, 0
    %v219 = vsel %vm203, 1, 0
    %v220 = vsel %vm204, 1, 0
    %v221 = vadd.s32 %v171, %v205
    %v222 = vadd.s32 %v172, %v206
    %v223 = vadd.s32 %v173, %v207
    %v224 = vadd.s32 %v174, %v208
    %v225 = vadd.s32 %v175, %v209
    %v226 = vadd.s32 %v176, %v210
    %v227 = vadd.s32 %v177, %v211
    %v228 = vadd.s32 %v178, %v212
    %v229 = vadd.s32 %v179, %v213
    %v230 = vadd.s32 %v180, %v214
    %v231 = vadd.s32 %v181, %v215
    %v232 = vadd.s32 %v182, %v216
    %v233 = vadd.s32 %v183, %v217
    %v234 = vadd.s32 %v184, %v218
    %v235 = vadd.s32 %v185, %v219
    %v236 = vadd.s32 %v186, %v220
    %v237 = vld [vmem:[#allocation3 + $0x3] sm:$0x1]
    %v238 = vperm.slane %v237, 0
    %vm239 = vcmp.eq.s32.totalorder %v238, %v87
    %vm240 = vcmp.eq.s32.totalorder %v238, %v88
    %vm241 = vcmp.eq.s32.totalorder %v238, %v89
    %vm242 = vcmp.eq.s32.totalorder %v238, %v90
    %vm243 = vcmp.eq.s32.totalorder %v238, %v91
    %vm244 = vcmp.eq.s32.totalorder %v238, %v92
    %vm245 = vcmp.eq.s32.totalorder %v238, %v93
    %vm246 = vcmp.eq.s32.totalorder %v238, %v94
    %vm247 = vcmp.eq.s32.totalorder %v238, %v95
    %vm248 = vcmp.eq.s32.totalorder %v238, %v96
    %vm249 = vcmp.eq.s32.totalorder %v238, %v97
    %vm250 = vcmp.eq.s32.totalorder %v238, %v98
    %vm251 = vcmp.eq.s32.totalorder %v238, %v99
    %vm252 = vcmp.eq.s32.totalorder %v238, %v100
    %vm253 = vcmp.eq.s32.totalorder %v238, %v101
    %vm254 = vcmp.eq.s32.totalorder %v238, %v102
    %v255 = vsel %vm239, 1, 0
    %v256 = vsel %vm240, 1, 0
    %v257 = vsel %vm241, 1, 0
    %v258 = vsel %vm242, 1, 0
    %v259 = vsel %vm243, 1, 0
    %v260 = vsel %vm244, 1, 0
    %v261 = vsel %vm245, 1, 0
    %v262 = vsel %vm246, 1, 0
    %v263 = vsel %vm247, 1, 0
    %v264 = vsel %vm248, 1, 0
    %v265 = vsel %vm249, 1, 0
    %v266 = vsel %vm250, 1, 0
    %v267 = vsel %vm251, 1, 0
    %v268 = vsel %vm252, 1, 0
    %v269 = vsel %vm253, 1, 0
    %v270 = vsel %vm254, 1, 0
    %v271 = vadd.s32 %v221, %v255
    %v272 = vadd.s32 %v222, %v256
    %v273 = vadd.s32 %v223, %v257
    %v274 = vadd.s32 %v224, %v258
    %v275 = vadd.s32 %v225, %v259
    %v276 = vadd.s32 %v226, %v260
    %v277 = vadd.s32 %v227, %v261
    %v278 = vadd.s32 %v228, %v262
    %v279 = vadd.s32 %v229, %v263
    %v280 = vadd.s32 %v230, %v264
    %v281 = vadd.s32 %v231, %v265
    %v282 = vadd.s32 %v232, %v266
    %v283 = vadd.s32 %v233, %v267
    %v284 = vadd.s32 %v234, %v268
    %v285 = vadd.s32 %v235, %v269
    %v286 = vadd.s32 %v236, %v270
    %v287 = vld [vmem:[#allocation3 + $0x4] sm:$0x1]
    %v288 = vperm.slane %v287, 0
    %vm289 = vcmp.eq.s32.totalorder %v288, %v87
    %vm290 = vcmp.eq.s32.totalorder %v288, %v88
    %vm291 = vcmp.eq.s32.totalorder %v288, %v89
    %vm292 = vcmp.eq.s32.totalorder %v288, %v90
    %vm293 = vcmp.eq.s32.totalorder %v288, %v91
    %vm294 = vcmp.eq.s32.totalorder %v288, %v92
    %vm295 = vcmp.eq.s32.totalorder %v288, %v93
    %vm296 = vcmp.eq.s32.totalorder %v288, %v94
    %vm297 = vcmp.eq.s32.totalorder %v288, %v95
    %vm298 = vcmp.eq.s32.totalorder %v288, %v96
    %vm299 = vcmp.eq.s32.totalorder %v288, %v97
    %vm300 = vcmp.eq.s32.totalorder %v288, %v98
    %vm301 = vcmp.eq.s32.totalorder %v288, %v99
    %vm302 = vcmp.eq.s32.totalorder %v288, %v100
    %vm303 = vcmp.eq.s32.totalorder %v288, %v101
    %vm304 = vcmp.eq.s32.totalorder %v288, %v102
    %v305 = vsel %vm289, 1, 0
    %v306 = vsel %vm290, 1, 0
    %v307 = vsel %vm291, 1, 0
    %v308 = vsel %vm292, 1, 0
    %v309 = vsel %vm293, 1, 0
    %v310 = vsel %vm294, 1, 0
    %v311 = vsel %vm295, 1, 0
    %v312 = vsel %vm296, 1, 0
    %v313 = vsel %vm297, 1, 0
    %v314 = vsel %vm298, 1, 0
    %v315 = vsel %vm299, 1, 0
    %v316 = vsel %vm300, 1, 0
    %v317 = vsel %vm301, 1, 0
    %v318 = vsel %vm302, 1, 0
    %v319 = vsel %vm303, 1, 0
    %v320 = vsel %vm304, 1, 0
    %v321 = vadd.s32 %v271, %v305
    %v322 = vadd.s32 %v272, %v306
    %v323 = vadd.s32 %v273, %v307
    %v324 = vadd.s32 %v274, %v308
    %v325 = vadd.s32 %v275, %v309
    %v326 = vadd.s32 %v276, %v310
    %v327 = vadd.s32 %v277, %v311
    %v328 = vadd.s32 %v278, %v312
    %v329 = vadd.s32 %v279, %v313
    %v330 = vadd.s32 %v280, %v314
    %v331 = vadd.s32 %v281, %v315
    %v332 = vadd.s32 %v282, %v316
    %v333 = vadd.s32 %v283, %v317
    %v334 = vadd.s32 %v284, %v318
    %v335 = vadd.s32 %v285, %v319
    %v336 = vadd.s32 %v286, %v320
    %v337 = vld [vmem:[#allocation3 + $0x5] sm:$0x1]
    %v338 = vperm.slane %v337, 0
    %vm339 = vcmp.eq.s32.totalorder %v338, %v87
    %vm340 = vcmp.eq.s32.totalorder %v338, %v88
    %vm341 = vcmp.eq.s32.totalorder %v338, %v89
    %vm342 = vcmp.eq.s32.totalorder %v338, %v90
    %vm343 = vcmp.eq.s32.totalorder %v338, %v91
    %vm344 = vcmp.eq.s32.totalorder %v338, %v92
    %vm345 = vcmp.eq.s32.totalorder %v338, %v93
    %vm346 = vcmp.eq.s32.totalorder %v338, %v94
    %vm347 = vcmp.eq.s32.totalorder %v338, %v95
    %vm348 = vcmp.eq.s32.totalorder %v338, %v96
    %vm349 = vcmp.eq.s32.totalorder %v338, %v97
    %vm350 = vcmp.eq.s32.totalorder %v338, %v98
    %vm351 = vcmp.eq.s32.totalorder %v338, %v99
    %vm352 = vcmp.eq.s32.totalorder %v338, %v100
    %vm353 = vcmp.eq.s32.totalorder %v338, %v101
    %vm354 = vcmp.eq.s32.totalorder %v338, %v102
    %v355 = vsel %vm339, 1, 0
    %v356 = vsel %vm340, 1, 0
    %v357 = vsel %vm341, 1, 0
    %v358 = vsel %vm342, 1, 0
    %v359 = vsel %vm343, 1, 0
    %v360 = vsel %vm344, 1, 0
    %v361 = vsel %vm345, 1, 0
    %v362 = vsel %vm346, 1, 0
    %v363 = vsel %vm347, 1, 0
    %v364 = vsel %vm348, 1, 0
    %v365 = vsel %vm349, 1, 0
    %v366 = vsel %vm350, 1, 0
    %v367 = vsel %vm351, 1, 0
    %v368 = vsel %vm352, 1, 0
    %v369 = vsel %vm353, 1, 0
    %v370 = vsel %vm354, 1, 0
    %v371 = vadd.s32 %v321, %v355
    %v372 = vadd.s32 %v322, %v356
    %v373 = vadd.s32 %v323, %v357
    %v374 = vadd.s32 %v324, %v358
    %v375 = vadd.s32 %v325, %v359
    %v376 = vadd.s32 %v326, %v360
    %v377 = vadd.s32 %v327, %v361
    %v378 = vadd.s32 %v328, %v362
    %v379 = vadd.s32 %v329, %v363
    %v380 = vadd.s32 %v330, %v364
    %v381 = vadd.s32 %v331, %v365
    %v382 = vadd.s32 %v332, %v366
    %v383 = vadd.s32 %v333, %v367
    %v384 = vadd.s32 %v334, %v368
    %v385 = vadd.s32 %v335, %v369
    %v386 = vadd.s32 %v336, %v370
    %v387 = vld [vmem:[#allocation3 + $0x6] sm:$0x1]
    %v388 = vperm.slane %v387, 0
    %vm389 = vcmp.eq.s32.totalorder %v388, %v87
    %vm390 = vcmp.eq.s32.totalorder %v388, %v88
    %vm391 = vcmp.eq.s32.totalorder %v388, %v89
    %vm392 = vcmp.eq.s32.totalorder %v388, %v90
    %vm393 = vcmp.eq.s32.totalorder %v388, %v91
    %vm394 = vcmp.eq.s32.totalorder %v388, %v92
    %vm395 = vcmp.eq.s32.totalorder %v388, %v93
    %vm396 = vcmp.eq.s32.totalorder %v388, %v94
    %vm397 = vcmp.eq.s32.totalorder %v388, %v95
    %vm398 = vcmp.eq.s32.totalorder %v388, %v96
    %vm399 = vcmp.eq.s32.totalorder %v388, %v97
    %vm400 = vcmp.eq.s32.totalorder %v388, %v98
    %vm401 = vcmp.eq.s32.totalorder %v388, %v99
    %vm402 = vcmp.eq.s32.totalorder %v388, %v100
    %vm403 = vcmp.eq.s32.totalorder %v388, %v101
    %vm404 = vcmp.eq.s32.totalorder %v388, %v102
    %v405 = vsel %vm389, 1, 0
    %v406 = vsel %vm390, 1, 0
    %v407 = vsel %vm391, 1, 0
    %v408 = vsel %vm392, 1, 0
    %v409 = vsel %vm393, 1, 0
    %v410 = vsel %vm394, 1, 0
    %v411 = vsel %vm395, 1, 0
    %v412 = vsel %vm396, 1, 0
    %v413 = vsel %vm397, 1, 0
    %v414 = vsel %vm398, 1, 0
    %v415 = vsel %vm399, 1, 0
    %v416 = vsel %vm400, 1, 0
    %v417 = vsel %vm401, 1, 0
    %v418 = vsel %vm402, 1, 0
    %v419 = vsel %vm403, 1, 0
    %v420 = vsel %vm404, 1, 0
    %v421 = vadd.s32 %v371, %v405
    %v422 = vadd.s32 %v372, %v406
    %v423 = vadd.s32 %v373, %v407
    %v424 = vadd.s32 %v374, %v408
    %v425 = vadd.s32 %v375, %v409
    %v426 = vadd.s32 %v376, %v410
    %v427 = vadd.s32 %v377, %v411
    %v428 = vadd.s32 %v378, %v412
    %v429 = vadd.s32 %v379, %v413
    %v430 = vadd.s32 %v380, %v414
    %v431 = vadd.s32 %v381, %v415
    %v432 = vadd.s32 %v382, %v416
    %v433 = vadd.s32 %v383, %v417
    %v434 = vadd.s32 %v384, %v418
    %v435 = vadd.s32 %v385, %v419
    %v436 = vadd.s32 %v386, %v420
    %v437 = vld [vmem:[#allocation3 + $0x7] sm:$0x1]
    %v438 = vperm.slane %v437, 0
    %vm439 = vcmp.eq.s32.totalorder %v438, %v87
    %vm440 = vcmp.eq.s32.totalorder %v438, %v88
    %vm441 = vcmp.eq.s32.totalorder %v438, %v89
    %vm442 = vcmp.eq.s32.totalorder %v438, %v90
    %vm443 = vcmp.eq.s32.totalorder %v438, %v91
    %vm444 = vcmp.eq.s32.totalorder %v438, %v92
    %vm445 = vcmp.eq.s32.totalorder %v438, %v93
    %vm446 = vcmp.eq.s32.totalorder %v438, %v94
    %vm447 = vcmp.eq.s32.totalorder %v438, %v95
    %vm448 = vcmp.eq.s32.totalorder %v438, %v96
    %vm449 = vcmp.eq.s32.totalorder %v438, %v97
    %vm450 = vcmp.eq.s32.totalorder %v438, %v98
    %vm451 = vcmp.eq.s32.totalorder %v438, %v99
    %vm452 = vcmp.eq.s32.totalorder %v438, %v100
    %vm453 = vcmp.eq.s32.totalorder %v438, %v101
    %vm454 = vcmp.eq.s32.totalorder %v438, %v102
    %v455 = vsel %vm439, 1, 0
    %v456 = vsel %vm440, 1, 0
    %v457 = vsel %vm441, 1, 0
    %v458 = vsel %vm442, 1, 0
    %v459 = vsel %vm443, 1, 0
    %v460 = vsel %vm444, 1, 0
    %v461 = vsel %vm445, 1, 0
    %v462 = vsel %vm446, 1, 0
    %v463 = vsel %vm447, 1, 0
    %v464 = vsel %vm448, 1, 0
    %v465 = vsel %vm449, 1, 0
    %v466 = vsel %vm450, 1, 0
    %v467 = vsel %vm451, 1, 0
    %v468 = vsel %vm452, 1, 0
    %v469 = vsel %vm453, 1, 0
    %v470 = vsel %vm454, 1, 0
    %v471 = vadd.s32 %v421, %v455
    %v472 = vadd.s32 %v422, %v456
    %v473 = vadd.s32 %v423, %v457
    %v474 = vadd.s32 %v424, %v458
    %v475 = vadd.s32 %v425, %v459
    %v476 = vadd.s32 %v426, %v460
    %v477 = vadd.s32 %v427, %v461
    %v478 = vadd.s32 %v428, %v462
    %v479 = vadd.s32 %v429, %v463
    %v480 = vadd.s32 %v430, %v464
    %v481 = vadd.s32 %v431, %v465
    %v482 = vadd.s32 %v432, %v466
    %v483 = vadd.s32 %v433, %v467
    %v484 = vadd.s32 %v434, %v468
    %v485 = vadd.s32 %v435, %v469
    %v486 = vadd.s32 %v436, %v470
    %v487 = vld [vmem:[#allocation2] sm:$0xff]
    %v488 = vcvt.s32.f32 %v471
    %v489 = vcvt.s32.f32 %v472
    %v490 = vcvt.s32.f32 %v473
    %v491 = vcvt.s32.f32 %v474
    %v492 = vcvt.s32.f32 %v475
    %v493 = vcvt.s32.f32 %v476
    %v494 = vcvt.s32.f32 %v477
    %v495 = vcvt.s32.f32 %v478
    %v496 = vcvt.s32.f32 %v479
    %v497 = vcvt.s32.f32 %v480
    %v498 = vcvt.s32.f32 %v481
    %v499 = vcvt.s32.f32 %v482
    %v500 = vcvt.s32.f32 %v483
    %v501 = vcvt.s32.f32 %v484
    %v502 = vcvt.s32.f32 %v485
    %v503 = vcvt.s32.f32 %v486
    %v504 = vld [vmem:[#allocation6] sm:$0xff]
    %v505 = vld [vmem:[#allocation6 + $0x8] sm:$0xff]
    %v506 = vld [vmem:[#allocation6 + $0x10] sm:$0xff]
    %v507 = vld [vmem:[#allocation6 + $0x18] sm:$0xff]
    %v508 = vld [vmem:[#allocation6 + $0x20] sm:$0xff]
    %v509 = vld [vmem:[#allocation6 + $0x28] sm:$0xff]
    %v510 = vld [vmem:[#allocation6 + $0x30] sm:$0xff]
    %v511 = vld [vmem:[#allocation6 + $0x38] sm:$0xff]
    %v512 = vld [vmem:[#allocation6 + $0x40] sm:$0xff]
    %v513 = vld [vmem:[#allocation6 + $0x48] sm:$0xff]
    %v514 = vld [vmem:[#allocation6 + $0x50] sm:$0xff]
    %v515 = vld [vmem:[#allocation6 + $0x58] sm:$0xff]
    %v516 = vld [vmem:[#allocation6 + $0x60] sm:$0xff]
    %v517 = vld [vmem:[#allocation6 + $0x68] sm:$0xff]
    %v518 = vld [vmem:[#allocation6 + $0x70] sm:$0xff]
    %v519 = vld [vmem:[#allocation6 + $0x78] sm:$0xff]
    %520 = vxpose.xlu0.b32.start [1/16] %v488, 128
    %521 = vxpose.xlu0.b32.cont [2/16] %v489, 128
    %522 = vxpose.xlu0.b32.cont [3/16] %v490, 128
    %523 = vxpose.xlu0.b32.cont [4/16] %v491, 128
    %524 = vxpose.xlu0.b32.cont [5/16] %v492, 128
    %525 = vxpose.xlu0.b32.cont [6/16] %v493, 128
    %526 = vxpose.xlu0.b32.cont [7/16] %v494, 128
    %527 = vxpose.xlu0.b32.cont [8/16] %v495, 128
    %528 = vxpose.xlu0.b32.cont [9/16] %v496, 128
    %529 = vxpose.xlu0.b32.cont [10/16] %v497, 128
    %530 = vxpose.xlu0.b32.cont [11/16] %v498, 128
    %531 = vxpose.xlu0.b32.cont [12/16] %v499, 128
    %532 = vxpose.xlu0.b32.cont [13/16] %v500, 128
    %533 = vxpose.xlu0.b32.cont [14/16] %v501, 128
    %534 = vxpose.xlu0.b32.cont [15/16] %v502, 128
    %535 = vxpose.xlu0.b32.end [16/16] %v503, 128
    %v536 = vpop.trf.xlu0
    %v537 = vpop.trf.xlu0
    %v538 = vpop.trf.xlu0
    %v539 = vpop.trf.xlu0
    %v540 = vpop.trf.xlu0
    %v541 = vpop.trf.xlu0
    %v542 = vpop.trf.xlu0
    %v543 = vpop.trf.xlu0
    %v544 = vpop.trf.xlu0
    %v545 = vpop.trf.xlu0
    %v546 = vpop.trf.xlu0
    %v547 = vpop.trf.xlu0
    %v548 = vpop.trf.xlu0
    %v549 = vpop.trf.xlu0
    %v550 = vpop.trf.xlu0
    %v551 = vpop.trf.xlu0
    %552 = vmatpush.msra.mxu0 %v519
    %553 = vmatpush.msra.mxu0 %v518
    %554 = vmatpush.msra.mxu0 %v517
    %555 = vmatpush.msra.mxu0 %v516
    %556 = vmatpush.msra.mxu0 %v515
    %557 = vmatpush.msra.mxu0 %v514
    %558 = vmatpush.msra.mxu0 %v513
    %559 = vmatpush.msra.mxu0 %v512
    %560 = vmatpush.msra.mxu0 %v511
    %561 = vmatpush.msra.mxu0 %v510
    %562 = vmatpush.msra.mxu0 %v509
    %563 = vmatpush.msra.mxu0 %v508
    %564 = vmatpush.msra.mxu0 %v507
    %565 = vmatpush.msra.mxu0 %v506
    %566 = vmatpush.msra.mxu0 %v505
    %567 = vmatpush.msra.mxu0 %v504
    %568 = vmatmul.f32.gmra.mxu0 %v536
    %v569 = vpop.f32.mrf.mxu0
    %v570 = vadd.f32 0.0, %v569
    %571 = vdwg.mxu0
    %v572 = vadd.f32 %v487, %v570
    %573 = vst [vmem:[#allocation2] sm:$0xff] %v572
    // Predicated region
    $region34: #{tpu_custom_call.1} parent=1 // pred_check
      %p574 = pneg %p63
    $region35: #{tpu_custom_call.1} parent=1 // pred_check_branch
      %576 = sbr.rel (%p574) target = $region37
    $region36: #{tpu_custom_call.1} parent=1 // pred_region
      %v577 = vld [vmem:[#allocation2] sm:$0xff]
      %v578 = vmul.f32 %v577, 0.125
      %v579 = vld [vmem:[#allocation8] sm:$0xff]
      %v580 = vld [vmem:[#allocation8 + $0x8] sm:$0xff]
      %v581 = vld [vmem:[#allocation8 + $0x10] sm:$0xff]
      %v582 = vld [vmem:[#allocation8 + $0x18] sm:$0xff]
      %v583 = vld [vmem:[#allocation8 + $0x20] sm:$0xff]
      %v584 = vld [vmem:[#allocation8 + $0x28] sm:$0xff]
      %v585 = vld [vmem:[#allocation8 + $0x30] sm:$0xff]
      %v586 = vld [vmem:[#allocation8 + $0x38] sm:$0xff]
      %v587 = vld [vmem:[#allocation8 + $0x40] sm:$0xff]
      %v588 = vld [vmem:[#allocation8 + $0x48] sm:$0xff]
      %v589 = vld [vmem:[#allocation8 + $0x50] sm:$0xff]
      %v590 = vld [vmem:[#allocation8 + $0x58] sm:$0xff]
      %v591 = vld [vmem:[#allocation8 + $0x60] sm:$0xff]
      %v592 = vld [vmem:[#allocation8 + $0x68] sm:$0xff]
      %v593 = vld [vmem:[#allocation8 + $0x70] sm:$0xff]
      %v594 = vld [vmem:[#allocation8 + $0x78] sm:$0xff]
      %v595 = vld [vmem:[%s3] sm:$0x1]
      %v597 = vperm.slane %v595, 0
      %599 = vmatpush.msra.mxu0 %v594
      %600 = vmatpush.msra.mxu0 %v593
      %601 = vmatpush.msra.mxu0 %v592
      %602 = vmatpush.msra.mxu0 %v591
      %603 = vmatpush.msra.mxu0 %v590
      %604 = vmatpush.msra.mxu0 %v589
      %605 = vmatpush.msra.mxu0 %v588
      %606 = vmatpush.msra.mxu0 %v587
      %607 = vmatpush.msra.mxu0 %v586
      %608 = vmatpush.msra.mxu0 %v585
      %609 = vmatpush.msra.mxu0 %v584
      %610 = vmatpush.msra.mxu0 %v583
      %611 = vmatpush.msra.mxu0 %v582
      %612 = vmatpush.msra.mxu0 %v581
      %613 = vmatpush.msra.mxu0 %v580
      %614 = vmatpush.msra.mxu0 %v579
      %615 = vmatmul.f32.gmra.mxu0 %v578
      %v616 = vpop.f32.mrf.mxu0
      %v617 = vadd.f32 %v597, %v616
      %618 = vdwg.mxu0
      %619 = vst [vmem:[#allocation9] sm:$0xff] %v617
    $region37: #{tpu_custom_call.1} parent=1 // pred_fallthru
      _
    // Predicated region
    $region38: #{tpu_custom_call.1} parent=1 // pred_check
      _
    $region39: #{tpu_custom_call.1} parent=1 // pred_check_branch
      %621 = sbr.rel (0) target = $region41
    $region40: #{tpu_custom_call.1} parent=1 // pred_region
      %623 = vsyncadd [#allocation5], 0
      %s625 = sshll.u32 [#allocation9], 4
      %s626 = int_to_ptr.vmem [resolvable:$true] %s625
      %s627 = sshll.u32 %s4, 4
      %s628 = int_to_ptr.hbm [resolvable:$true] %s627
      %630 = dma.vmem_to_hbm [thread:$0]  %s626, 128, %s628, [#allocation5]
    $region41: #{tpu_custom_call.1} parent=1 // pred_fallthru
      _
    // Predicated region
    $region42: #{tpu_custom_call.1} parent=1 // pred_check
      _
    $region43: #{tpu_custom_call.1} parent=1 // pred_check_branch
      %632 = sbr.rel (0) target = $region45
    $region44: #{tpu_custom_call.1} parent=1 // pred_region
      %634 = dma.done [#allocation5], 128
    $region45: #{tpu_custom_call.1} parent=1 // pred_fallthru
      _
    %635 = vsyncpa [#allocation4], 1
    %636 = vsyncpa [#allocation7], 1
    %637 = vsyncpa [#allocation5], 1

</llo_original>
